<compile_context>
chip_gen: v7x
topology: tpu7x:2x2x1
jax: 0.10.0
libtpu: 0.0.40
codegen_flags: <defaults>
</compile_context>

<pallas_src>
import functools

import jax
import jax.numpy as jnp
from jax.experimental import pallas as pl
from jax.experimental.pallas import tpu as pltpu


# ---------------------------------------------------------------------------
# Fused kernel: grid = (sweep, M-tile)
#   sweep 0: (Cout,K)@(K,TM) MXU matmul -> resident VMEM y, accumulate stats
#   sweep 1: fold BN into scale/bias once, then out = max(y*scale + bias, 0)
# ---------------------------------------------------------------------------
def _fused_conv_bn_relu_kernel(w_ref, p_ref, g_ref, b_ref, o_ref,
                               y_ref, sum_ref, ssq_ref, sb_ref,
                               *, m_total, eps):
    s = pl.program_id(0)   # 0 = conv + stats sweep, 1 = BN + ReLU sweep
    i = pl.program_id(1)   # M-tile index

    @pl.when(jnp.logical_and(s == 0, i == 0))
    def _():
        sum_ref[...] = jnp.zeros_like(sum_ref)
        ssq_ref[...] = jnp.zeros_like(ssq_ref)

    @pl.when(s == 0)
    def _():
        # Single MXU matmul for this tile, fp32 accumulation, lane-dense TM.
        acc = jnp.dot(w_ref[...], p_ref[...],
                      preferred_element_type=jnp.float32)
        y_ref[i] = acc
        # Zero-padded M columns contribute exact zeros (conv has no bias), so
        # dividing by the true m_total below stays correct.
        sum_ref[...] += jnp.sum(acc, axis=1, keepdims=True)
        ssq_ref[...] += jnp.sum(acc * acc, axis=1, keepdims=True)

    @pl.when(jnp.logical_and(s == 1, i == 0))
    def _():
        inv_m = jnp.float32(1.0 / m_total)
        mean = sum_ref[...] * inv_m
        var = ssq_ref[...] * inv_m - mean * mean              # biased batch var
        scale = g_ref[...] * jax.lax.rsqrt(var + jnp.float32(eps))
        sb_ref[0] = scale
        sb_ref[1] = b_ref[...] - mean * scale

    @pl.when(s == 1)
    def _():
        y = y_ref[i]
        o_ref[...] = jnp.maximum(
            y * sb_ref[0] + sb_ref[1], 0.0).astype(o_ref.dtype)


# ---------------------------------------------------------------------------
# Streamed two-pass fallback (resident y would not fit VMEM, e.g. huge M on
# v7x's 64 MiB/TC): pass 1 writes y in the compute dtype + folded scale/bias,
# pass 2 is a megacore-parallel FMA + ReLU.
# ---------------------------------------------------------------------------
def _conv_stats_kernel(w_ref, p_ref, g_ref, b_ref, y_ref, scale_ref, bias_ref,
                       sum_ref, ssq_ref, *, m_total, eps):
    i = pl.program_id(0)

    @pl.when(i == 0)
    def _():
        sum_ref[...] = jnp.zeros_like(sum_ref)
        ssq_ref[...] = jnp.zeros_like(ssq_ref)

    acc = jnp.dot(w_ref[...], p_ref[...], preferred_element_type=jnp.float32)
    y_ref[...] = acc.astype(y_ref.dtype)
    sum_ref[...] += jnp.sum(acc, axis=1, keepdims=True)
    ssq_ref[...] += jnp.sum(acc * acc, axis=1, keepdims=True)

    @pl.when(i == pl.num_programs(0) - 1)
    def _():
        inv_m = jnp.float32(1.0 / m_total)
        mean = sum_ref[...] * inv_m
        var = ssq_ref[...] * inv_m - mean * mean
        scale = g_ref[...] * jax.lax.rsqrt(var + jnp.float32(eps))
        scale_ref[...] = scale
        bias_ref[...] = b_ref[...] - mean * scale


def _bn_relu_kernel(y_ref, scale_ref, bias_ref, o_ref):
    y = y_ref[...].astype(jnp.float32)
    o_ref[...] = jnp.maximum(
        y * scale_ref[...] + bias_ref[...], 0.0).astype(o_ref.dtype)


# ---------------------------------------------------------------------------
# Wrapper
# ---------------------------------------------------------------------------
def basic_conv2d(x_nchw, w_oihw, gamma, beta, *, stride=1, padding=0,
                 eps=1e-3, tm=512, compute_dtype=jnp.bfloat16,
                 force_streamed=False):
    """Forward pass of BasicConv2d. x_nchw: (N,Cin,H,W); w_oihw: (Cout,Cin,KH,KW)."""
    n, cin, h, w = x_nchw.shape
    cout, _, kh, kw = w_oihw.shape
    oh = (h + 2 * padding - kh) // stride + 1
    ow = (w + 2 * padding - kw) // stride + 1
    m = n * oh * ow
    k = kh * kw * cin
    out_dtype = x_nchw.dtype
    c_size = jnp.dtype(compute_dtype).itemsize
    o_size = jnp.dtype(out_dtype).itemsize

    # M tile: multiple of 128, no bigger than the (128-rounded) problem size.
    tm = max(128, (int(tm) // 128) * 128)
    tm = min(tm, pl.cdiv(m, 128) * 128)
    m_pad = pl.cdiv(m, tm) * tm
    n_tiles = m_pad // tm

    # ---- layout glue: im2col without relaying out the 9x-expanded array ----
    # NCHW -> CNHW once (on the small, un-expanded input), cast to the matmul
    # operand dtype BEFORE the tap expansion so the im2col buffer is written
    # at operand width.
    x_cnhw = jnp.transpose(x_nchw, (1, 0, 2, 3)).astype(compute_dtype)
    x_p = jnp.pad(x_cnhw,
                  ((0, 0), (0, 0), (padding, padding), (padding, padding)))
    taps = []
    for ikh in range(kh):
        for ikw in range(kw):
            taps.append(x_p[:, :, ikh:ikh + (oh - 1) * stride + 1:stride,
                               ikw:ikw + (ow - 1) * stride + 1:stride])
    # (KH*KW, Cin, N, OH, OW) -> (K, M): merging leading/trailing axes only.
    patches = jnp.stack(taps, axis=0).reshape(k, m)
    if m_pad != m:
        patches = jnp.pad(patches, ((0, 0), (0, m_pad - m)))
    # OIHW -> (Cout, K) with K ordered (kh, kw, cin) to match the patch rows.
    w_t = jnp.transpose(w_oihw, (0, 2, 3, 1)).reshape(cout, k).astype(compute_dtype)
    gamma2d = gamma.reshape(cout, 1).astype(jnp.float32)
    beta2d = beta.reshape(cout, 1).astype(jnp.float32)

    # VMEM budget, sized against v7x's 64 MiB/TC: resident fp32 conv output
    # plus double-buffered patch/output tiles and the resident weights.
    y_resident = n_tiles * cout * tm * 4
    per_tile = 2 * k * tm * c_size + 2 * cout * tm * o_size + cout * k * c_size
    use_fused = (not force_streamed) and (y_resident + per_tile <= 40 * 2**20)

    if use_fused:
        vmem_limit = int(min(60 * 2**20,
                             max(24 * 2**20, y_resident + per_tile + (8 << 20))))
        cost = pl.CostEstimate(
            flops=2 * cout * k * m_pad + 4 * cout * m_pad,
            transcendentals=cout,
            bytes_accessed=(cout * k + k * m_pad) * c_size
                           + cout * m_pad * o_size + 4 * cout * 4)
        kernel = functools.partial(_fused_conv_bn_relu_kernel,
                                   m_total=m, eps=eps)
        out_cm = pl.pallas_call(
            kernel,
            out_shape=jax.ShapeDtypeStruct((cout, m_pad), out_dtype),
            grid=(2, n_tiles),
            in_specs=[
                pl.BlockSpec((cout, k), lambda s, i: (0, 0)),     # weights
                # patch tile: (0, i) on sweep 0; frozen at the last tile on
                # sweep 1 so no patch bytes are re-fetched.
                pl.BlockSpec((k, tm),
                             lambda s, i: (0, i * (1 - s) + (n_tiles - 1) * s)),
                pl.BlockSpec((cout, 1), lambda s, i: (0, 0)),     # gamma
                pl.BlockSpec((cout, 1), lambda s, i: (0, 0)),     # beta
            ],
            # Output block stays pinned to tile 0 during sweep 0 (never
            # flushed), then walks the tiles on sweep 1 once valid data exists.
            out_specs=pl.BlockSpec((cout, tm), lambda s, i: (0, i * s)),
            scratch_shapes=[
                pltpu.VMEM((n_tiles, cout, tm), jnp.float32),  # resident conv y
                pltpu.VMEM((cout, 1), jnp.float32),            # running sum
                pltpu.VMEM((cout, 1), jnp.float32),            # running sum sq
                pltpu.VMEM((2, cout, 1), jnp.float32),         # folded scale/bias
            ],
            compiler_params=pltpu.CompilerParams(
                dimension_semantics=("arbitrary", "arbitrary"),
                vmem_limit_bytes=vmem_limit),
            cost_estimate=cost,
        )(w_t, patches, gamma2d, beta2d)
    else:
        # ---- streamed two-pass fallback ----
        conv_kernel = functools.partial(_conv_stats_kernel, m_total=m, eps=eps)
        y_conv, scale, bias = pl.pallas_call(
            conv_kernel,
            out_shape=(jax.ShapeDtypeStruct((cout, m_pad), compute_dtype),
                       jax.ShapeDtypeStruct((cout, 1), jnp.float32),
                       jax.ShapeDtypeStruct((cout, 1), jnp.float32)),
            grid=(n_tiles,),
            in_specs=[
                pl.BlockSpec((cout, k), lambda i: (0, 0)),
                pl.BlockSpec((k, tm), lambda i: (0, i)),
                pl.BlockSpec((cout, 1), lambda i: (0, 0)),
                pl.BlockSpec((cout, 1), lambda i: (0, 0)),
            ],
            out_specs=(
                pl.BlockSpec((cout, tm), lambda i: (0, i)),
                pl.BlockSpec((cout, 1), lambda i: (0, 0)),
                pl.BlockSpec((cout, 1), lambda i: (0, 0)),
            ),
            scratch_shapes=[pltpu.VMEM((cout, 1), jnp.float32),
                            pltpu.VMEM((cout, 1), jnp.float32)],
            compiler_params=pltpu.CompilerParams(
                dimension_semantics=("arbitrary",),
                vmem_limit_bytes=int(min(60 * 2**20,
                                         max(32 * 2**20, 2 * per_tile)))),
        )(w_t, patches, gamma2d, beta2d)

        out_cm = pl.pallas_call(
            _bn_relu_kernel,
            out_shape=jax.ShapeDtypeStruct((cout, m_pad), out_dtype),
            grid=(n_tiles,),
            in_specs=[
                pl.BlockSpec((cout, tm), lambda i: (0, i)),
                pl.BlockSpec((cout, 1), lambda i: (0, 0)),
                pl.BlockSpec((cout, 1), lambda i: (0, 0)),
            ],
            out_specs=pl.BlockSpec((cout, tm), lambda i: (0, i)),
            compiler_params=pltpu.CompilerParams(
                dimension_semantics=("parallel",),
                vmem_limit_bytes=32 * 1024 * 1024),
        )(y_conv, scale, bias)

    # ---- layout glue: (Cout, M) -> NCHW ----
    out = out_cm[:, :m].reshape(cout, n, oh, ow)
    return jnp.transpose(out, (1, 0, 2, 3))


def _reference(x_nchw, w_oihw, gamma, beta, *, stride, padding, eps):
    y = jax.lax.conv_general_dilated(
        x_nchw, w_oihw, window_strides=(stride, stride),
        padding=[(padding, padding), (padding, padding)],
        dimension_numbers=("NCHW", "OIHW", "NCHW"))
    mean = jnp.mean(y, axis=(0, 2, 3), keepdims=True)
    var = jnp.mean((y - mean) ** 2, axis=(0, 2, 3), keepdims=True)
    y = (y - mean) * jax.lax.rsqrt(var + eps)
    y = y * gamma[None, :, None, None] + beta[None, :, None, None]
    return jnp.maximum(y, 0.0)


if __name__ == "__main__":
    # Module config: in_planes=4, out_planes=8, kernel_size=3, stride=1, padding=1
    N, CIN, H, W = 2, 4, 16, 16
    COUT, KH, KW = 8, 3, 3
    STRIDE, PAD, EPS = 1, 1, 1e-3

    key = jax.random.PRNGKey(0)
    kx, kw_ = jax.random.split(key)
    x = jax.random.normal(kx, (N, CIN, H, W), dtype=jnp.float32)
    conv_w = jax.random.normal(kw_, (COUT, CIN, KH, KW), dtype=jnp.float32) * 0.1
    gamma = jnp.linspace(0.5, 1.5, COUT, dtype=jnp.float32)   # bn.weight
    beta = jnp.linspace(-0.2, 0.2, COUT, dtype=jnp.float32)   # bn.bias

    ref = _reference(x, conv_w, gamma, beta, stride=STRIDE, padding=PAD, eps=EPS)

    # 1) Fused kernel, fp32 operands (validation path, tight tolerance).
    out_f32 = jax.block_until_ready(
        basic_conv2d(x, conv_w, gamma, beta, stride=STRIDE, padding=PAD,
                     eps=EPS, compute_dtype=jnp.float32))
    assert out_f32.shape == (N, COUT, H, W), out_f32.shape
    assert jnp.allclose(out_f32, ref, atol=2e-4, rtol=2e-4), "fp32 fused mismatch"

    # 2) Fused kernel with multiple M tiles (exercises pinned/walking blocks).
    out_mt = jax.block_until_ready(
        basic_conv2d(x, conv_w, gamma, beta, stride=STRIDE, padding=PAD,
                     eps=EPS, tm=128, compute_dtype=jnp.float32))
    assert jnp.allclose(out_mt, ref, atol=2e-4, rtol=2e-4), "multi-tile mismatch"

    # 3) Streamed two-pass fallback (the large-M / v7x-VMEM path).
    out_st = jax.block_until_ready(
        basic_conv2d(x, conv_w, gamma, beta, stride=STRIDE, padding=PAD,
                     eps=EPS, compute_dtype=jnp.float32, force_streamed=True))
    assert jnp.allclose(out_st, ref, atol=2e-4, rtol=2e-4), "streamed mismatch"

    # 4) Default performance path: bf16 MXU operands, fp32 accumulation/BN.
    out_bf16 = jax.block_until_ready(
        basic_conv2d(x, conv_w, gamma, beta, stride=STRIDE, padding=PAD, eps=EPS))
    assert jnp.allclose(out_bf16.astype(jnp.float32), ref,
                        atol=5e-2, rtol=5e-2), "bf16 fused mismatch"

    print("KERNEL_OK")
</pallas_src>

<mosaic_0001>
module attributes {stable_mosaic.version = 11 : i64} {
  func.func @_fused_conv_bn_relu_kernel(%arg0: i32, %arg1: i32, %arg2: memref<8x36xf32, #tpu.memory_space<vmem>>, %arg3: memref<36x512xf32, #tpu.memory_space<vmem>>, %arg4: memref<8x1xf32, #tpu.memory_space<vmem>>, %arg5: memref<8x1xf32, #tpu.memory_space<vmem>>, %arg6: memref<8x512xf32, #tpu.memory_space<vmem>>, %arg7: memref<1x8x512xf32, #tpu.memory_space<vmem>>, %arg8: memref<8x1xf32, #tpu.memory_space<vmem>>, %arg9: memref<8x1xf32, #tpu.memory_space<vmem>>, %arg10: memref<2x8x1xf32, #tpu.memory_space<vmem>>) attributes {dimension_semantics = [#tpu.dimension_semantics<arbitrary>, #tpu.dimension_semantics<arbitrary>], iteration_bounds = array<i64: 2, 1>, scalar_prefetch = 0 : i64, scratch_operands = 4 : i64, tpu.core_type = #tpu.core_type<tc>, window_params = [{pipeline_mode = #tpu.pipeline_mode<synchronous>, transform_indices = @transform_0, window_bounds = array<i64: 8, 36>}, {transform_indices = @transform_1, window_bounds = array<i64: 36, 512>}, {pipeline_mode = #tpu.pipeline_mode<synchronous>, transform_indices = @transform_2, window_bounds = array<i64: 8, 1>}, {pipeline_mode = #tpu.pipeline_mode<synchronous>, transform_indices = @transform_3, window_bounds = array<i64: 8, 1>}, {transform_indices = @transform_4, window_bounds = array<i64: 8, 512>}]} {
    %c0_i32 = arith.constant 0 : i32
    %0 = arith.cmpi eq, %arg0, %c0_i32 : i32
    %c0_i32_0 = arith.constant 0 : i32
    %1 = arith.cmpi eq, %arg1, %c0_i32_0 : i32
    %2 = arith.andi %0, %1 : i1
    %3 = arith.extui %2 : i1 to i32
    %c0_i32_1 = arith.constant 0 : i32
    %4 = arith.cmpi ne, %3, %c0_i32_1 : i32
    scf.if %4 {
      %cst = arith.constant 0.000000e+00 : f32
      %16 = vector.broadcast %cst : f32 to vector<8x1xf32>
      %c0 = arith.constant 0 : index
      %c0_8 = arith.constant 0 : index
      %17 = vector.load %arg8[%c0, %c0_8] : memref<8x1xf32, #tpu.memory_space<vmem>>, vector<8x1xf32>
      tpu.vector_store %arg8[%c0, %c0_8], %16 {strides = array<i32>} : memref<8x1xf32, #tpu.memory_space<vmem>>, vector<8x1xf32>,
      %cst_9 = arith.constant 0.000000e+00 : f32
      %18 = vector.broadcast %cst_9 : f32 to vector<8x1xf32>
      %c0_10 = arith.constant 0 : index
      %c0_11 = arith.constant 0 : index
      %19 = vector.load %arg9[%c0_10, %c0_11] : memref<8x1xf32, #tpu.memory_space<vmem>>, vector<8x1xf32>
      tpu.vector_store %arg9[%c0_10, %c0_11], %18 {strides = array<i32>} : memref<8x1xf32, #tpu.memory_space<vmem>>, vector<8x1xf32>,
    } else {
    }
    %c0_i32_2 = arith.constant 0 : i32
    %5 = arith.cmpi eq, %arg0, %c0_i32_2 : i32
    %6 = arith.extui %5 : i1 to i32
    %c0_i32_3 = arith.constant 0 : i32
    %7 = arith.cmpi ne, %6, %c0_i32_3 : i32
    scf.if %7 {
      %c0 = arith.constant 0 : index
      %c0_8 = arith.constant 0 : index
      %16 = vector.load %arg2[%c0, %c0_8] : memref<8x36xf32, #tpu.memory_space<vmem>>, vector<8x36xf32>
      %c0_9 = arith.constant 0 : index
      %c0_10 = arith.constant 0 : index
      %17 = vector.load %arg3[%c0_9, %c0_10] : memref<36x512xf32, #tpu.memory_space<vmem>>, vector<36x512xf32>
      %cst = arith.constant dense<0.000000e+00> : vector<8x512xf32>
      %18 = tpu.matmul %16, %17, %cst {dimension_numbers = #tpu.dot_dimension_numbers<[1], [0], [0], [1], [0, 0, 1, 1], [], []>} : vector<8x36xf32>, vector<36x512xf32>, vector<8x512xf32> -> vector<8x512xf32>
      %19 = arith.index_cast %arg1 : i32 to index
      %c0_11 = arith.constant 0 : index
      %c0_12 = arith.constant 0 : index
      %20 = vector.load %arg7[%19, %c0_11, %c0_12] : memref<1x8x512xf32, #tpu.memory_space<vmem>>, vector<1x8x512xf32>
      %21 = vector.shape_cast %20 : vector<1x8x512xf32> to vector<8x512xf32>
      %22 = vector.shape_cast %18 : vector<8x512xf32> to vector<1x8x512xf32>
      tpu.vector_store %arg7[%19, %c0_11, %c0_12], %22 {strides = array<i32>} : memref<1x8x512xf32, #tpu.memory_space<vmem>>, vector<1x8x512xf32>,
      %c0_13 = arith.constant 0 : index
      %c0_14 = arith.constant 0 : index
      %23 = vector.load %arg8[%c0_13, %c0_14] : memref<8x1xf32, #tpu.memory_space<vmem>>, vector<8x1xf32>
      %cst_15 = arith.constant dense<0.000000e+00> : vector<8xf32>
      %24 = vector.multi_reduction <add>, %18, %cst_15 [1] : vector<8x512xf32> to vector<8xf32>
      %25 = vector.shape_cast %24 : vector<8xf32> to vector<8x1xf32>
      %26 = arith.addf %23, %25 : vector<8x1xf32>
      %c0_16 = arith.constant 0 : index
      %c0_17 = arith.constant 0 : index
      %27 = vector.load %arg8[%c0_16, %c0_17] : memref<8x1xf32, #tpu.memory_space<vmem>>, vector<8x1xf32>
      tpu.vector_store %arg8[%c0_16, %c0_17], %26 {strides = array<i32>} : memref<8x1xf32, #tpu.memory_space<vmem>>, vector<8x1xf32>,
      %c0_18 = arith.constant 0 : index
      %c0_19 = arith.constant 0 : index
      %28 = vector.load %arg9[%c0_18, %c0_19] : memref<8x1xf32, #tpu.memory_space<vmem>>, vector<8x1xf32>
      %29 = arith.mulf %18, %18 : vector<8x512xf32>
      %cst_20 = arith.constant dense<0.000000e+00> : vector<8xf32>
      %30 = vector.multi_reduction <add>, %29, %cst_20 [1] : vector<8x512xf32> to vector<8xf32>
      %31 = vector.shape_cast %30 : vector<8xf32> to vector<8x1xf32>
      %32 = arith.addf %28, %31 : vector<8x1xf32>
      %c0_21 = arith.constant 0 : index
      %c0_22 = arith.constant 0 : index
      %33 = vector.load %arg9[%c0_21, %c0_22] : memref<8x1xf32, #tpu.memory_space<vmem>>, vector<8x1xf32>
      tpu.vector_store %arg9[%c0_21, %c0_22], %32 {strides = array<i32>} : memref<8x1xf32, #tpu.memory_space<vmem>>, vector<8x1xf32>,
    } else {
    }
    %c1_i32 = arith.constant 1 : i32
    %8 = arith.cmpi eq, %arg0, %c1_i32 : i32
    %c0_i32_4 = arith.constant 0 : i32
    %9 = arith.cmpi eq, %arg1, %c0_i32_4 : i32
    %10 = arith.andi %8, %9 : i1
    %11 = arith.extui %10 : i1 to i32
    %c0_i32_5 = arith.constant 0 : i32
    %12 = arith.cmpi ne, %11, %c0_i32_5 : i32
    scf.if %12 {
      %c0 = arith.constant 0 : index
      %c0_8 = arith.constant 0 : index
      %16 = vector.load %arg8[%c0, %c0_8] : memref<8x1xf32, #tpu.memory_space<vmem>>, vector<8x1xf32>
      %cst = arith.constant 0.001953125 : f32
      %17 = vector.broadcast %cst : f32 to vector<8x1xf32>
      %18 = arith.mulf %16, %17 : vector<8x1xf32>
      %c0_9 = arith.constant 0 : index
      %c0_10 = arith.constant 0 : index
      %19 = vector.load %arg9[%c0_9, %c0_10] : memref<8x1xf32, #tpu.memory_space<vmem>>, vector<8x1xf32>
      %cst_11 = arith.constant 0.001953125 : f32
      %20 = vector.broadcast %cst_11 : f32 to vector<8x1xf32>
      %21 = arith.mulf %19, %20 : vector<8x1xf32>
      %22 = arith.mulf %18, %18 : vector<8x1xf32>
      %23 = arith.subf %21, %22 : vector<8x1xf32>
      %c0_12 = arith.constant 0 : index
      %c0_13 = arith.constant 0 : index
      %24 = vector.load %arg4[%c0_12, %c0_13] : memref<8x1xf32, #tpu.memory_space<vmem>>, vector<8x1xf32>
      %cst_14 = arith.constant 1.000000e-03 : f32
      %25 = vector.broadcast %cst_14 : f32 to vector<8x1xf32>
      %26 = arith.addf %23, %25 : vector<8x1xf32>
      %27 = math.rsqrt %26 : vector<8x1xf32>
      %28 = arith.mulf %24, %27 : vector<8x1xf32>
      %c0_15 = arith.constant 0 : index
      %c0_16 = arith.constant 0 : index
      %c0_17 = arith.constant 0 : index
      %29 = vector.load %arg10[%c0_15, %c0_16, %c0_17] : memref<2x8x1xf32, #tpu.memory_space<vmem>>, vector<1x8x1xf32>
      %30 = vector.shape_cast %29 : vector<1x8x1xf32> to vector<8x1xf32>
      %31 = vector.shape_cast %28 : vector<8x1xf32> to vector<1x8x1xf32>
      tpu.vector_store %arg10[%c0_15, %c0_16, %c0_17], %31 {strides = array<i32>} : memref<2x8x1xf32, #tpu.memory_space<vmem>>, vector<1x8x1xf32>,
      %c0_18 = arith.constant 0 : index
      %c0_19 = arith.constant 0 : index
      %32 = vector.load %arg5[%c0_18, %c0_19] : memref<8x1xf32, #tpu.memory_space<vmem>>, vector<8x1xf32>
      %33 = arith.mulf %18, %28 : vector<8x1xf32>
      %34 = arith.subf %32, %33 : vector<8x1xf32>
      %c1 = arith.constant 1 : index
      %c0_20 = arith.constant 0 : index
      %c0_21 = arith.constant 0 : index
      %35 = vector.load %arg10[%c1, %c0_20, %c0_21] : memref<2x8x1xf32, #tpu.memory_space<vmem>>, vector<1x8x1xf32>
      %36 = vector.shape_cast %35 : vector<1x8x1xf32> to vector<8x1xf32>
      %37 = vector.shape_cast %34 : vector<8x1xf32> to vector<1x8x1xf32>
      tpu.vector_store %arg10[%c1, %c0_20, %c0_21], %37 {strides = array<i32>} : memref<2x8x1xf32, #tpu.memory_space<vmem>>, vector<1x8x1xf32>,
    } else {
    }
    %c1_i32_6 = arith.constant 1 : i32
    %13 = arith.cmpi eq, %arg0, %c1_i32_6 : i32
    %14 = arith.extui %13 : i1 to i32
    %c0_i32_7 = arith.constant 0 : i32
    %15 = arith.cmpi ne, %14, %c0_i32_7 : i32
    scf.if %15 {
      %16 = arith.index_cast %arg1 : i32 to index
      %c0 = arith.constant 0 : index
      %c0_8 = arith.constant 0 : index
      %17 = vector.load %arg7[%16, %c0, %c0_8] : memref<1x8x512xf32, #tpu.memory_space<vmem>>, vector<1x8x512xf32>
      %18 = vector.shape_cast %17 : vector<1x8x512xf32> to vector<8x512xf32>
      %c0_9 = arith.constant 0 : index
      %c0_10 = arith.constant 0 : index
      %c0_11 = arith.constant 0 : index
      %19 = vector.load %arg10[%c0_9, %c0_10, %c0_11] : memref<2x8x1xf32, #tpu.memory_space<vmem>>, vector<1x8x1xf32>
      %20 = vector.shape_cast %19 : vector<1x8x1xf32> to vector<8x1xf32>
      %21 = vector.broadcast %20 : vector<8x1xf32> to vector<8x512xf32>
      %22 = arith.mulf %18, %21 : vector<8x512xf32>
      %c1 = arith.constant 1 : index
      %c0_12 = arith.constant 0 : index
      %c0_13 = arith.constant 0 : index
      %23 = vector.load %arg10[%c1, %c0_12, %c0_13] : memref<2x8x1xf32, #tpu.memory_space<vmem>>, vector<1x8x1xf32>
      %24 = vector.shape_cast %23 : vector<1x8x1xf32> to vector<8x1xf32>
      %25 = vector.broadcast %24 : vector<8x1xf32> to vector<8x512xf32>
      %26 = arith.addf %22, %25 : vector<8x512xf32>
      %cst = arith.constant 0.000000e+00 : f32
      %27 = vector.broadcast %cst : f32 to vector<8x512xf32>
      %28 = arith.maximumf %26, %27 : vector<8x512xf32>
      %c0_14 = arith.constant 0 : index
      %c0_15 = arith.constant 0 : index
      %29 = vector.load %arg6[%c0_14, %c0_15] : memref<8x512xf32, #tpu.memory_space<vmem>>, vector<8x512xf32>
      tpu.vector_store %arg6[%c0_14, %c0_15], %28 {strides = array<i32>} : memref<8x512xf32, #tpu.memory_space<vmem>>, vector<8x512xf32>,
    } else {
    }
    return
  }
  func.func @transform_0(%arg0: i32, %arg1: i32) -> (i32, i32) {
    %c0_i32 = arith.constant 0 : i32
    %c0_i32_0 = arith.constant 0 : i32
    %c0_i32_1 = arith.constant 0 : i32
    return %c0_i32, %c0_i32_0 : i32, i32
  }
  func.func @transform_1(%arg0: i32, %arg1: i32) -> (i32, i32) {
    %c1_i32 = arith.constant 1 : i32
    %0 = arith.subi %c1_i32, %arg0 : i32
    %1 = arith.muli %arg1, %0 : i32
    %c0_i32 = arith.constant 0 : i32
    %2 = arith.muli %c0_i32, %arg0 : i32
    %3 = arith.addi %1, %2 : i32
    %c0_i32_0 = arith.constant 0 : i32
    %c0_i32_1 = arith.constant 0 : i32
    return %c0_i32_0, %3 : i32, i32
  }
  func.func @transform_2(%arg0: i32, %arg1: i32) -> (i32, i32) {
    %c0_i32 = arith.constant 0 : i32
    %c0_i32_0 = arith.constant 0 : i32
    %c0_i32_1 = arith.constant 0 : i32
    return %c0_i32, %c0_i32_0 : i32, i32
  }
  func.func @transform_3(%arg0: i32, %arg1: i32) -> (i32, i32) {
    %c0_i32 = arith.constant 0 : i32
    %c0_i32_0 = arith.constant 0 : i32
    %c0_i32_1 = arith.constant 0 : i32
    return %c0_i32, %c0_i32_0 : i32, i32
  }
  func.func @transform_4(%arg0: i32, %arg1: i32) -> (i32, i32) {
    %0 = arith.muli %arg1, %arg0 : i32
    %c0_i32 = arith.constant 0 : i32
    %c0_i32_0 = arith.constant 0 : i32
    return %c0_i32, %0 : i32, i32
  }
}

</mosaic_0001>

<llo_original>
// kernel: tpu_custom_call.1
$region0: #{tpu_custom_call.1}
  #allocation0 [shape = 'u32[]', space=smem, size = 0x4, offset = 0x4, fixed_abs, tag = 'smem constant byte address 0x4 - core index']
  #allocation1 [shape = 'u32[144,128]{1,0:T(1,128)}', space=vmem, size = 0x12000, scoped, tag = 'internal scratch']
  #allocation2 [shape = 'f32[1,8,512]{2,1,0:T(8,128)}', space=vmem, size = 0x4000, scoped, tag = 'scratch operand']
  #allocation3 [shape = 'f32[8,1]{1,0:T(8,128)}', space=vmem, size = 0x1000, scoped, tag = 'scratch operand']
  #allocation4 [shape = 'f32[8,1]{1,0:T(8,128)}', space=vmem, size = 0x1000, scoped, tag = 'scratch operand']
  #allocation5 [shape = 'f32[2,8,1]{2,1,0:T(8,128)}', space=vmem, size = 0x2000, scoped, tag = 'scratch operand']
  %s0 = inlined_call_operand.vmem [shape: f32[8,36], index: 0, kind: input, shape index: {}]
  %s1 = inlined_call_operand.hbm [shape: f32[36,512], index: 1, kind: input, shape index: {}]
  %s2 = inlined_call_operand.vmem [shape: f32[8,1], index: 2, kind: input, shape index: {}]
  %s3 = inlined_call_operand.vmem [shape: f32[8,1], index: 3, kind: input, shape index: {}]
  %s4 = inlined_call_operand.hbm [shape: f32[8,512], index: 4, kind: output, shape index: {}]
  %s5 = sld [smem:[#allocation0]]
  $region69: #{tpu_custom_call.1} parent=0
    _
  %s7 = ssub.s32 1, %s5
  %s8 = scalar_select 0, %s7, %s5
  $region1: #{tpu_custom_call.1} parent=0
    #allocation6 [shape = 'u8[163840]{0}', space=vmem, size = 0x28000, scoped, tag = 'input window, operand 1']
    #allocation7 [shape = 's32[2]{0}', space=sflag, size = 0x8, scoped, tag = 'scoped memory for tpu_custom_call.1']
    #allocation8 [shape = 's32[2]{0}', space=sflag, size = 0x8, scoped, tag = 'scoped memory for tpu_custom_call.1']
    #allocation9 [shape = 'u8[32768]{0}', space=vmem, size = 0x8000, scoped, tag = 'output window, operand 0']
    %9 = vsyncpa [#allocation7], 0
    %s10 = scalar_lea.sflag [#allocation7], 1
    %11 = vsyncpa %s10, 0
    %12 = vsyncpa [#allocation8], 0
    %s13 = scalar_lea.sflag [#allocation8], 1
    %14 = vsyncpa %s13, 0
    loop: start=0, step=1, limit=4
    $region2: #{tpu_custom_call.1} parent=1 // loop_pre_header
      _
    $region3: #{tpu_custom_call.1} parent=1 // loop_header
      %s16 = sphi 0, %s20
      %p17 = scmp.ge.s32.totalorder %s16, 4
      %s23 = sphi 0, %s35
      %s24 = sphi 0, %s31
      %s25 = sphi 0, %s23
      %s26 = sphi 0, %s24
      %s27 = sphi 0, %s25
      %s28 = sphi 0, %s26
      %s36 = sphi 0, %s36
      %s38 = sphi 0, %s36
      %s39 = sphi 0, %s38
      %s53 = sphi 0, %s39
      %s63 = sphi 0, %s65
      %s66 = sphi 0, %s63
      %s67 = sphi 0, %s66
      %s83 = sphi 0, %s67
      %s87 = sphi 0, %s87
      %s89 = sphi 0, %s87
      %s90 = sphi 0, %s89
      %s104 = sphi 0, %s90
      %s108 = sphi 0, %s108
      %s110 = sphi 0, %s108
      %s111 = sphi 0, %s110
      %s125 = sphi 0, %s111
      %s133 = sphi 0, %s135
      %s136 = sphi 0, %s133
      %s137 = sphi 0, %s136
      %s153 = sphi 0, %s137
    $region4: #{tpu_custom_call.1} parent=1 // loop_header_branch
      %19 = sbr.rel (%p17) target = $region8
    $region5: #{tpu_custom_call.1} parent=1 // loop_body
      %s21 = ssub.s32 %s16, 1
      %s22 = ssub.s32 %s16, 2
      %s29 = sadd.s32 1, %s24
      %p30 = scmp.ge.s32.totalorder %s29, 1
      %s31 = scalar_select %p30, 0, %s29
      %s32 = sadd.s32 1, %s23
      %s33 = scalar_select %p30, %s32, %s23
      %p34 = scmp.ge.s32.totalorder %s33, 2
      %s35 = scalar_select %p34, 0, %s33
      %s37 = sadd.s32 %s36, 1
      %p40 = scmp.eq.s32.totalorder %s16, 1
      %p41 = scmp.ne.s32.totalorder %s36, %s38
      %p42 = scmp.eq.s32.totalorder %s16, 0
      %p43 = por %p41, %p42
      %p44 = scmp.ne.s32.totalorder %s36, %s38
      %p45 = scmp.eq.s32.totalorder %s21, 1
      %p46 = por %p44, %p45
      %p47 = scmp.ne.s32.totalorder %s38, %s39
      %p48 = scmp.eq.s32.totalorder %s21, 0
      %p49 = por %p47, %p48
      %p50 = scmp.ne.s32.totalorder %s38, %s39
      %p51 = scmp.eq.s32.totalorder %s22, 1
      %p52 = por %p50, %p51
      %p54 = scmp.ne.s32.totalorder %s39, %s53
      %p55 = scmp.eq.s32.totalorder %s22, 0
      %p56 = por %p54, %p55
      %s57 = ssub.s32 1, %s23
      %s58 = smul.u32 %s24, %s57
      %s59 = ssub.s32 1, %s35
      %s60 = smul.u32 %s31, %s59
      %s61 = ssub.s32 %s58, %s60
      %p62 = scmp.eq.s32.totalorder %s61, 0
      %s64 = sadd.s32 %s63, 1
      %s65 = scalar_select %p62, %s63, %s64
      %p68 = pneg %p62
      %p69 = scmp.eq.s32.totalorder %s16, 1
      %p70 = por %p68, %p69
      %p71 = scmp.ne.s32.totalorder %s63, %s66
      %p72 = scmp.eq.s32.totalorder %s16, 0
      %p73 = por %p71, %p72
      %p74 = scmp.ne.s32.totalorder %s63, %s66
      %p75 = scmp.eq.s32.totalorder %s21, 1
      %p76 = por %p74, %p75
      %p77 = scmp.ne.s32.totalorder %s66, %s67
      %p78 = scmp.eq.s32.totalorder %s21, 0
      %p79 = por %p77, %p78
      %p80 = scmp.ne.s32.totalorder %s66, %s67
      %p81 = scmp.eq.s32.totalorder %s22, 1
      %p82 = por %p80, %p81
      %p84 = scmp.ne.s32.totalorder %s67, %s83
      %p85 = scmp.eq.s32.totalorder %s22, 0
      %p86 = por %p84, %p85
      %s88 = sadd.s32 %s87, 1
      %p91 = scmp.eq.s32.totalorder %s16, 1
      %p92 = scmp.ne.s32.totalorder %s87, %s89
      %p93 = scmp.eq.s32.totalorder %s16, 0
      %p94 = por %p92, %p93
      %p95 = scmp.ne.s32.totalorder %s87, %s89
      %p96 = scmp.eq.s32.totalorder %s21, 1
      %p97 = por %p95, %p96
      %p98 = scmp.ne.s32.totalorder %s89, %s90
      %p99 = scmp.eq.s32.totalorder %s21, 0
      %p100 = por %p98, %p99
      %p101 = scmp.ne.s32.totalorder %s89, %s90
      %p102 = scmp.eq.s32.totalorder %s22, 1
      %p103 = por %p101, %p102
      %p105 = scmp.ne.s32.totalorder %s90, %s104
      %p106 = scmp.eq.s32.totalorder %s22, 0
      %p107 = por %p105, %p106
      %s109 = sadd.s32 %s108, 1
      %p112 = scmp.eq.s32.totalorder %s16, 1
      %p113 = scmp.ne.s32.totalorder %s108, %s110
      %p114 = scmp.eq.s32.totalorder %s16, 0
      %p115 = por %p113, %p114
      %p116 = scmp.ne.s32.totalorder %s108, %s110
      %p117 = scmp.eq.s32.totalorder %s21, 1
      %p118 = por %p116, %p117
      %p119 = scmp.ne.s32.totalorder %s110, %s111
      %p120 = scmp.eq.s32.totalorder %s21, 0
      %p121 = por %p119, %p120
      %p122 = scmp.ne.s32.totalorder %s110, %s111
      %p123 = scmp.eq.s32.totalorder %s22, 1
      %p124 = por %p122, %p123
      %p126 = scmp.ne.s32.totalorder %s111, %s125
      %p127 = scmp.eq.s32.totalorder %s22, 0
      %p128 = por %p126, %p127
      %s129 = smul.u32 %s24, %s23
      %s130 = smul.u32 %s31, %s35
      %s131 = ssub.s32 %s129, %s130
      %p132 = scmp.eq.s32.totalorder %s131, 0
      %s134 = sadd.s32 %s133, 1
      %s135 = scalar_select %p132, %s133, %s134
      %p138 = pneg %p132
      %p139 = scmp.eq.s32.totalorder %s16, 1
      %p140 = por %p138, %p139
      %p141 = scmp.ne.s32.totalorder %s133, %s136
      %p142 = scmp.eq.s32.totalorder %s16, 0
      %p143 = por %p141, %p142
      %p144 = scmp.ne.s32.totalorder %s133, %s136
      %p145 = scmp.eq.s32.totalorder %s21, 1
      %p146 = por %p144, %p145
      %p147 = scmp.ne.s32.totalorder %s136, %s137
      %p148 = scmp.eq.s32.totalorder %s21, 0
      %p149 = por %p147, %p148
      %p150 = scmp.ne.s32.totalorder %s136, %s137
      %p151 = scmp.eq.s32.totalorder %s22, 1
      %p152 = por %p150, %p151
      %p154 = scmp.ne.s32.totalorder %s137, %s153
      %p155 = scmp.eq.s32.totalorder %s22, 0
      %p156 = por %p154, %p155
      %p157 = scmp.le.s32.totalorder 1, %s16
      %p158 = scmp.lt.s32.totalorder %s16, 3
      %p159 = pnand %p157, %p158
      %p160 = pneg %p159
      // Predicated region
      $region9: #{tpu_custom_call.1} parent=5 // pred_check
        _
      $region10: #{tpu_custom_call.1} parent=5 // pred_check_branch
        %162 = sbr.rel (%p159) target = $region12
      $region11: #{tpu_custom_call.1} parent=5 // pred_region
        %s163 = ssub.s32 %s16, 1
        // Predicated region
        $region13: #{tpu_custom_call.1} parent=11 // pred_check
          %p164 = pneg %p49
        $region14: #{tpu_custom_call.1} parent=11 // pred_check_branch
          %166 = sbr.rel (%p164) target = $region16
        $region15: #{tpu_custom_call.1} parent=11 // pred_region
          _
        $region16: #{tpu_custom_call.1} parent=11 // pred_fallthru
          _
        // Predicated region
        $region17: #{tpu_custom_call.1} parent=11 // pred_check
          %p167 = pneg %p100
        $region18: #{tpu_custom_call.1} parent=11 // pred_check_branch
          %169 = sbr.rel (%p167) target = $region20
        $region19: #{tpu_custom_call.1} parent=11 // pred_region
          _
        $region20: #{tpu_custom_call.1} parent=11 // pred_fallthru
          _
        // Predicated region
        $region21: #{tpu_custom_call.1} parent=11 // pred_check
          %p170 = pneg %p121
        $region22: #{tpu_custom_call.1} parent=11 // pred_check_branch
          %172 = sbr.rel (%p170) target = $region24
        $region23: #{tpu_custom_call.1} parent=11 // pred_region
          _
        $region24: #{tpu_custom_call.1} parent=11 // pred_fallthru
          _
      $region12: #{tpu_custom_call.1} parent=5 // pred_fallthru
        _
      %p173 = scmp.lt.s32.totalorder %s16, 2
      // Predicated region
      $region25: #{tpu_custom_call.1} parent=5 // pred_check
        %p174 = pneg %p173
      $region26: #{tpu_custom_call.1} parent=5 // pred_check_branch
        %176 = sbr.rel (%p174) target = $region28
      $region27: #{tpu_custom_call.1} parent=5 // pred_region
        // Predicated region
        $region29: #{tpu_custom_call.1} parent=27 // pred_check
          %p177 = pneg %p73
        $region30: #{tpu_custom_call.1} parent=27 // pred_check_branch
          %179 = sbr.rel (%p177) target = $region32
        $region31: #{tpu_custom_call.1} parent=27 // pred_region
          %s180 = sand.u32 %s63, 1
          %s181 = scalar_lea.sflag [#allocation7], %s180
          %s182 = sand.u32 %s63, 1
          %s183 = smul.addr %s182, 160
          %s184 = scalar_lea.vmem [#allocation6], %s183
          %s185 = ssub.s32 1, %s23
          %s186 = smul.u32 %s24, %s185
          %s187 = smul.u32 4, %s186
          %s189 = ssub.s32 2560, 2560
          %190 = vsyncadd %s181, %s189
          %s191 = smul.addr %s187, 128
          %s192 = scalar_lea.hbm %s1, %s191
          %s193 = sshll.u32 %s184, 4
          %s194 = int_to_ptr.vmem [resolvable:$true] %s193
          %199 = dma.hbm_to_vmem [thread:$0]  %s192, 2560, %s194, %s181, 512, 512, 32
        $region32: #{tpu_custom_call.1} parent=27 // pred_fallthru
          _
      $region28: #{tpu_custom_call.1} parent=5 // pred_fallthru
        _
      %p200 = scmp.le.s32.totalorder 1, %s16
      %p201 = scmp.lt.s32.totalorder %s16, 3
      %p202 = pnand %p200, %p201
      %p203 = pneg %p202
      // Predicated region
      $region33: #{tpu_custom_call.1} parent=5 // pred_check
        _
      $region34: #{tpu_custom_call.1} parent=5 // pred_check_branch
        %205 = sbr.rel (%p202) target = $region36
      $region35: #{tpu_custom_call.1} parent=5 // pred_region
        %s206 = ssub.s32 %s16, 1
        %s207 = sand.u32 %s66, 1
        %s208 = scalar_lea.sflag [#allocation7], %s207
        %s209 = sand.u32 %s66, 1
        %s210 = smul.addr %s209, 160
        %s211 = scalar_lea.vmem [#allocation6], %s210
        // Predicated region
        $region37: #{tpu_custom_call.1} parent=35 // pred_check
          %p212 = pneg %p79
        $region38: #{tpu_custom_call.1} parent=35 // pred_check_branch
          %214 = sbr.rel (%p212) target = $region40
        $region39: #{tpu_custom_call.1} parent=35 // pred_region
          %215 = dma.done %s208, 2560
        $region40: #{tpu_custom_call.1} parent=35 // pred_fallthru
          _
        %p216 = pneg %p49
        %p217 = pneg %p46
        %s218 = sand.u32 %s66, 1
        %s219 = scalar_lea.sflag [#allocation7], %s218
        %s220 = sand.u32 %s66, 1
        %s221 = smul.addr %s220, 160
        %s222 = scalar_lea.vmem [#allocation6], %s221
        %p223 = pneg %p79
        %p224 = pneg %p76
        %p225 = pneg %p100
        %p226 = pneg %p97
        %p227 = pneg %p121
        %p228 = pneg %p118
        %p229 = pneg %p149
        %p230 = pneg %p146
        %s231 = sand.u32 %s136, 1
        %s232 = scalar_lea.sflag [#allocation8], %s231
        %s233 = sand.u32 %s136, 1
        %s234 = smul.addr %s233, 32
        %s235 = scalar_lea.vmem [#allocation9], %s234
        %s236 = ssub.s32 1, %s25
        %s237 = smul.u32 %s26, %s236
        %s238 = smul.u32 4, %s237
        %s239 = smul.u32 %s26, %s25
        %s240 = smul.u32 4, %s239
        %p241 = scmp.eq.s32.totalorder %s25, 0
        %p242 = scmp.eq.s32.totalorder %s26, 0
        %p243 = pnand %p241, %p242
        %p244 = pneg %p243
        // Predicated region
        $region41: #{tpu_custom_call.1} parent=35 // pred_check
          _
        $region42: #{tpu_custom_call.1} parent=35 // pred_check_branch
          %246 = sbr.rel (%p243) target = $region44
        $region43: #{tpu_custom_call.1} parent=35 // pred_region
          %vm247 = vcmask 7168
          %248 = vst.msk [vmem:[#allocation3] sm:$0xff] %vm247, 0.0
          %249 = vst.msk [vmem:[#allocation4] sm:$0xff] %vm247, 0.0
        $region44: #{tpu_custom_call.1} parent=35 // pred_fallthru
          _
        // Predicated region
        $region45: #{tpu_custom_call.1} parent=35 // pred_check
          %p250 = pneg %p241
        $region46: #{tpu_custom_call.1} parent=35 // pred_check_branch
          %252 = sbr.rel (%p250) target = $region48
        $region47: #{tpu_custom_call.1} parent=35 // pred_region
          %v253 = vld [vmem:[%s0] sm:$0xff]
          %v254 = vld [vmem:[%s211] sm:$0xff]
          %v255 = vld [vmem:[%s211 + $0x8] sm:$0xff]
          %v256 = vld [vmem:[%s211 + $0x10] sm:$0xff]
          %v257 = vld [vmem:[%s211 + $0x18] sm:$0xff]
          %v258 = vld [vmem:[%s211 + $0x20] sm:$0xff]
          %v259 = vld [vmem:[%s211 + $0x28] sm:$0xff]
          %v260 = vld [vmem:[%s211 + $0x30] sm:$0xff]
          %v261 = vld [vmem:[%s211 + $0x38] sm:$0xff]
          %v262 = vld [vmem:[%s211 + $0x40] sm:$0xff]
          %v263 = vld [vmem:[%s211 + $0x48] sm:$0xff]
          %v264 = vld [vmem:[%s211 + $0x50] sm:$0xff]
          %v265 = vld [vmem:[%s211 + $0x58] sm:$0xff]
          %v266 = vld [vmem:[%s211 + $0x60] sm:$0xff]
          %v267 = vld [vmem:[%s211 + $0x68] sm:$0xff]
          %v268 = vld [vmem:[%s211 + $0x70] sm:$0xff]
          %v269 = vld [vmem:[%s211 + $0x78] sm:$0xff]
          %v270 = vld [vmem:[%s211 + $0x80] sm:$0xf]
          %v271 = vld [vmem:[%s211 + $0x88] sm:$0xf]
          %v272 = vld [vmem:[%s211 + $0x90] sm:$0xf]
          %v273 = vld [vmem:[%s211 + $0x98] sm:$0xf]
          %vm274 = vcmask 293888
          %v276 = vsel %vm274, %v253, 0
          %vm278 = vcmask 1043456
          %v280 = vsel %vm278, %v270, 0
          %v283 = vsel %vm278, %v271, 0
          %v286 = vsel %vm278, %v272, 0
          %v289 = vsel %vm278, %v273, 0
          %291 = vmatprep.subr.mxu0 %v255
          %292 = vmatpush1.msra.mxu0 %v254
          %293 = vmatprep.subr.mxu0 %v259
          %294 = vmatpush1.msra.mxu0 %v258
          %295 = vmatprep.subr.mxu0 %v263
          %296 = vmatpush1.msra.mxu0 %v262
          %297 = vmatprep.subr.mxu0 %v267
          %298 = vmatpush1.msra.mxu0 %v266
          %299 = vmatprep.subr.mxu0 %v283
          %300 = vmatpush1.msra.mxu0 %v280
          %301 = vmatprep.subr.mxu0 0.0
          %302 = vmatpush1.msra.mxu0 0.0
          %303 = vmatprep.subr.mxu0 0.0
          %304 = vmatpush1.msra.mxu0 0.0
          %305 = vmatprep.subr.mxu0 0.0
          %306 = vmatpush1.msra.mxu0 0.0
          %307 = vmatprep.subr.mxu0 0.0
          %308 = vmatpush1.msra.mxu0 0.0
          %309 = vmatprep.subr.mxu0 0.0
          %310 = vmatpush1.msra.mxu0 0.0
          %311 = vmatprep.subr.mxu0 0.0
          %312 = vmatpush1.msra.mxu0 0.0
          %313 = vmatprep.subr.mxu0 0.0
          %314 = vmatpush1.msra.mxu0 0.0
          %315 = vmatprep.subr.mxu0 0.0
          %316 = vmatpush1.msra.mxu0 0.0
          %317 = vmatprep.subr.mxu0 0.0
          %318 = vmatpush1.msra.mxu0 0.0
          %319 = vmatprep.subr.mxu0 0.0
          %320 = vmatpush1.msra.mxu0 0.0
          %321 = vmatprep.subr.mxu0 0.0
          %322 = vmatpush1.msra.mxu0 0.0
          %323 = vmatprep.subr.mxu0 0.0
          %324 = vmatpush1.msra.mxu0 0.0
          %325 = vmatprep.subr.mxu0 0.0
          %326 = vmatpush1.msra.mxu0 0.0
          %327 = vmatprep.subr.mxu0 0.0
          %328 = vmatpush1.msra.mxu0 0.0
          %329 = vmatprep.subr.mxu0 0.0
          %330 = vmatpush1.msra.mxu0 0.0
          %331 = vmatprep.subr.mxu0 0.0
          %332 = vmatpush1.msra.mxu0 0.0
          %333 = vmatprep.subr.mxu0 0.0
          %334 = vmatpush1.msra.mxu0 0.0
          %335 = vmatprep.subr.mxu0 0.0
          %336 = vmatpush1.msra.mxu0 0.0
          %337 = vmatprep.subr.mxu0 0.0
          %338 = vmatpush1.msra.mxu0 0.0
          %339 = vmatprep.subr.mxu0 0.0
          %340 = vmatpush1.msra.mxu0 0.0
          %341 = vmatprep.subr.mxu0 0.0
          %342 = vmatpush1.msra.mxu0 0.0
          %343 = vmatprep.subr.mxu0 0.0
          %344 = vmatpush1.msra.mxu0 0.0
          %345 = vmatprep.subr.mxu0 0.0
          %346 = vmatpush1.msra.mxu0 0.0
          %347 = vmatprep.subr.mxu0 0.0
          %348 = vmatpush1.msra.mxu0 0.0
          %349 = vmatprep.subr.mxu0 0.0
          %350 = vmatpush1.msra.mxu0 0.0
          %351 = vmatprep.subr.mxu0 0.0
          %352 = vmatpush1.msra.mxu0 0.0
          %353 = vmatprep.subr.mxu0 0.0
          %354 = vmatpush1.msra.mxu0 0.0
          %355 = vmatprep.mubr.f32.mxu0 0.0
          %356 = vmatmul.mubr.f32.gmra.mrb[0].mxu0 %v276
          %v357 = vpop.f32.mrb[0].mxu0
          %v358 = vadd.f32 0.0, %v357
          %v359 = vpop.f32.mrb[0].mxu0
          %v360 = vadd.f32 0.0, %v359
          %361 = vdwg.mxu0
          %362 = vmatprep.subr.mxu0 %v257
          %363 = vmatpush1.msra.mxu0 %v256
          %364 = vmatprep.subr.mxu0 %v261
          %365 = vmatpush1.msra.mxu0 %v260
          %366 = vmatprep.subr.mxu0 %v265
          %367 = vmatpush1.msra.mxu0 %v264
          %368 = vmatprep.subr.mxu0 %v269
          %369 = vmatpush1.msra.mxu0 %v268
          %370 = vmatprep.subr.mxu0 %v289
          %371 = vmatpush1.msra.mxu0 %v286
          %372 = vmatprep.subr.mxu0 0.0
          %373 = vmatpush1.msra.mxu0 0.0
          %374 = vmatprep.subr.mxu0 0.0
          %375 = vmatpush1.msra.mxu0 0.0
          %376 = vmatprep.subr.mxu0 0.0
          %377 = vmatpush1.msra.mxu0 0.0
          %378 = vmatprep.subr.mxu0 0.0
          %379 = vmatpush1.msra.mxu0 0.0
          %380 = vmatprep.subr.mxu0 0.0
          %381 = vmatpush1.msra.mxu0 0.0
          %382 = vmatprep.subr.mxu0 0.0
          %383 = vmatpush1.msra.mxu0 0.0
          %384 = vmatprep.subr.mxu0 0.0
          %385 = vmatpush1.msra.mxu0 0.0
          %386 = vmatprep.subr.mxu0 0.0
          %387 = vmatpush1.msra.mxu0 0.0
          %388 = vmatprep.subr.mxu0 0.0
          %389 = vmatpush1.msra.mxu0 0.0
          %390 = vmatprep.subr.mxu0 0.0
          %391 = vmatpush1.msra.mxu0 0.0
          %392 = vmatprep.subr.mxu0 0.0
          %393 = vmatpush1.msra.mxu0 0.0
          %394 = vmatprep.subr.mxu0 0.0
          %395 = vmatpush1.msra.mxu0 0.0
          %396 = vmatprep.subr.mxu0 0.0
          %397 = vmatpush1.msra.mxu0 0.0
          %398 = vmatprep.subr.mxu0 0.0
          %399 = vmatpush1.msra.mxu0 0.0
          %400 = vmatprep.subr.mxu0 0.0
          %401 = vmatpush1.msra.mxu0 0.0
          %402 = vmatprep.subr.mxu0 0.0
          %403 = vmatpush1.msra.mxu0 0.0
          %404 = vmatprep.subr.mxu0 0.0
          %405 = vmatpush1.msra.mxu0 0.0
          %406 = vmatprep.subr.mxu0 0.0
          %407 = vmatpush1.msra.mxu0 0.0
          %408 = vmatprep.subr.mxu0 0.0
          %409 = vmatpush1.msra.mxu0 0.0
          %410 = vmatprep.subr.mxu0 0.0
          %411 = vmatpush1.msra.mxu0 0.0
          %412 = vmatprep.subr.mxu0 0.0
          %413 = vmatpush1.msra.mxu0 0.0
          %414 = vmatprep.subr.mxu0 0.0
          %415 = vmatpush1.msra.mxu0 0.0
          %416 = vmatprep.subr.mxu0 0.0
          %417 = vmatpush1.msra.mxu0 0.0
          %418 = vmatprep.subr.mxu0 0.0
          %419 = vmatpush1.msra.mxu0 0.0
          %420 = vmatprep.subr.mxu0 0.0
          %421 = vmatpush1.msra.mxu0 0.0
          %422 = vmatprep.subr.mxu0 0.0
          %423 = vmatpush1.msra.mxu0 0.0
          %424 = vmatprep.subr.mxu0 0.0
          %425 = vmatpush1.msra.mxu0 0.0
          %426 = vmatprep.mubr.f32.mxu0 0.0
          %427 = vmatmul.mubr.f32.gmra.mrb[0].mxu0 %v276
          %v428 = vpop.f32.mrb[0].mxu0
          %v429 = vadd.f32 0.0, %v428
          %v430 = vpop.f32.mrb[0].mxu0
          %v431 = vadd.f32 0.0, %v430
          %432 = vdwg.mxu0
          %s433 = smul.u32 %s26, 4
          %s434 = smul.addr %s433, 8
          %s435 = scalar_lea.vmem [#allocation2], %s434
          %436 = vst [vmem:[%s435] sm:$0xff] %v358
          %437 = vst [vmem:[%s435 + $0x8] sm:$0xff] %v360
          %438 = vst [vmem:[%s435 + $0x10] sm:$0xff] %v429
          %439 = vst [vmem:[%s435 + $0x18] sm:$0xff] %v431
          %v440 = vld [vmem:[#allocation3] sm:$0xff]
          %v441 = vadd.f32 %v358, %v360
          %v442 = vadd.f32 %v441, %v429
          %v443 = vadd.f32 %v442, %v431
          %444 = vadd.xlane.f32.xlu0 %v443
          %v445 = vpop.xlane.xlu0 %444
          %v446 = vadd.f32 %v440, %v445
          %vm447 = vcmask 7168
          %448 = vst.msk [vmem:[#allocation3] sm:$0xff] %vm447, %v446
          %v449 = vld [vmem:[#allocation4] sm:$0xff]
          %v450 = vmul.f32 %v358, %v358
          %v451 = vmul.f32 %v360, %v360
          %v452 = vmul.f32 %v429, %v429
          %v453 = vmul.f32 %v431, %v431
          %v454 = vadd.f32 %v450, %v451
          %v455 = vadd.f32 %v454, %v452
          %v456 = vadd.f32 %v455, %v453
          %457 = vadd.xlane.f32.xlu0 %v456
          %v458 = vpop.xlane.xlu0 %457
          %v459 = vadd.f32 %v449, %v458
          %460 = vst.msk [vmem:[#allocation4] sm:$0xff] %vm447, %v459
        $region48: #{tpu_custom_call.1} parent=35 // pred_fallthru
          _
        %p461 = scmp.eq.s32.totalorder %s25, 1
        %p462 = pnand %p461, %p242
        %p463 = pneg %p462
        // Predicated region
        $region49: #{tpu_custom_call.1} parent=35 // pred_check
          _
        $region50: #{tpu_custom_call.1} parent=35 // pred_check_branch
          %465 = sbr.rel (%p462) target = $region52
        $region51: #{tpu_custom_call.1} parent=35 // pred_region
          %v466 = vld [vmem:[#allocation3] sm:$0xff]
          %v467 = vmul.f32 %v466, 0.001953125
          %v468 = vld [vmem:[#allocation4] sm:$0xff]
          %v469 = vmul.f32 %v468, 0.001953125
          %v470 = vmul.f32 %v467, %v467
          %v471 = vsub.f32 %v469, %v470
          %v472 = vld [vmem:[%s2] sm:$0xff]
          %v473 = vadd.f32 %v471, 0.001
          %v474 = vrsqrt.pop %v473
          %v475 = vmul.f32 %v472, %v474
          %vm476 = vcmask 7168
          %477 = vst.msk [vmem:[#allocation5] sm:$0xff] %vm476, %v475
          %v478 = vld [vmem:[%s3] sm:$0xff]
          %v479 = vmul.f32 %v467, %v475
          %v480 = vsub.f32 %v478, %v479
          %s481 = scalar_lea.vmem [#allocation5], 8
          %482 = vst.msk [vmem:[%s481] sm:$0xff] %vm476, %v480
        $region52: #{tpu_custom_call.1} parent=35 // pred_fallthru
          _
        // Predicated region
        $region53: #{tpu_custom_call.1} parent=35 // pred_check
          %p483 = pneg %p461
        $region54: #{tpu_custom_call.1} parent=35 // pred_check_branch
          %485 = sbr.rel (%p483) target = $region56
        $region55: #{tpu_custom_call.1} parent=35 // pred_region
          %s486 = smul.u32 %s26, 4
          %s487 = smul.addr %s486, 8
          %s488 = scalar_lea.vmem [#allocation2], %s487
          %v489 = vld [vmem:[%s488] sm:$0xff]
          %v490 = vld [vmem:[%s488 + $0x8] sm:$0xff]
          %v491 = vld [vmem:[%s488 + $0x10] sm:$0xff]
          %v492 = vld [vmem:[%s488 + $0x18] sm:$0xff]
          %v493 = vld [vmem:[#allocation5] sm:$0xff]
          %495 = vset.pattern.permute.xlu0 0
          %496 = vperm.xlu0 %495, %v493
          %v497 = vpop.permute.xlu0 %496
          %v499 = vmul.f32 %v489, %v497
          %v500 = vmul.f32 %v490, %v497
          %v501 = vmul.f32 %v491, %v497
          %v502 = vmul.f32 %v492, %v497
          %s503 = scalar_lea.vmem [#allocation5], 8
          %v504 = vld [vmem:[%s503] sm:$0xff]
          %506 = vset.pattern.permute.xlu0 0
          %507 = vperm.xlu0 %506, %v504
          %v508 = vpop.permute.xlu0 %507
          %v510 = vadd.f32 %v499, %v508
          %v511 = vadd.f32 %v500, %v508
          %v512 = vadd.f32 %v501, %v508
          %v513 = vadd.f32 %v502, %v508
          %v514 = vmax.f32 %v510, 0.0
          %v515 = vmax.f32 %v511, 0.0
          %v516 = vmax.f32 %v512, 0.0
          %v517 = vmax.f32 %v513, 0.0
          %518 = vst [vmem:[%s235] sm:$0xff] %v514
          %519 = vst [vmem:[%s235 + $0x8] sm:$0xff] %v515
          %520 = vst [vmem:[%s235 + $0x10] sm:$0xff] %v516
          %521 = vst [vmem:[%s235 + $0x18] sm:$0xff] %v517
        $region56: #{tpu_custom_call.1} parent=35 // pred_fallthru
          _
        %s522 = sand.u32 %s136, 1
        %s523 = scalar_lea.sflag [#allocation8], %s522
        %s524 = sand.u32 %s136, 1
        %s525 = smul.addr %s524, 32
        %s526 = scalar_lea.vmem [#allocation9], %s525
        // Predicated region
        $region57: #{tpu_custom_call.1} parent=35 // pred_check
          %p527 = pneg %p146
        $region58: #{tpu_custom_call.1} parent=35 // pred_check_branch
          %529 = sbr.rel (%p527) target = $region60
        $region59: #{tpu_custom_call.1} parent=35 // pred_region
          %s530 = smul.u32 %s26, %s25
          %s531 = smul.u32 4, %s530
          %s533 = ssub.s32 512, 512
          %534 = vsyncadd %s523, %s533
          %s535 = smul.addr %s531, 128
          %s536 = scalar_lea.hbm %s4, %s535
          %s538 = sshll.u32 %s526, 4
          %s539 = int_to_ptr.vmem [resolvable:$true] %s538
          %541 = dma.vmem_to_hbm [thread:$0]  %s539, 512, %s536, %s523
        $region60: #{tpu_custom_call.1} parent=35 // pred_fallthru
          _
      $region36: #{tpu_custom_call.1} parent=5 // pred_fallthru
        _
      %p542 = scmp.le.s32.totalorder 2, %s16
      // Predicated region
      $region61: #{tpu_custom_call.1} parent=5 // pred_check
        %p543 = pneg %p542
      $region62: #{tpu_custom_call.1} parent=5 // pred_check_branch
        %545 = sbr.rel (%p543) target = $region64
      $region63: #{tpu_custom_call.1} parent=5 // pred_region
        %s546 = ssub.s32 %s16, 2
        // Predicated region
        $region65: #{tpu_custom_call.1} parent=63 // pred_check
          %p547 = pneg %p152
        $region66: #{tpu_custom_call.1} parent=63 // pred_check_branch
          %549 = sbr.rel (%p547) target = $region68
        $region67: #{tpu_custom_call.1} parent=63 // pred_region
          %s550 = sand.u32 %s137, 1
          %s551 = scalar_lea.sflag [#allocation8], %s550
          %s552 = sand.u32 %s137, 1
          %s553 = smul.addr %s552, 32
          %s554 = scalar_lea.vmem [#allocation9], %s553
          %555 = dma.done %s551, 512
        $region68: #{tpu_custom_call.1} parent=63 // pred_fallthru
          _
      $region64: #{tpu_custom_call.1} parent=5 // pred_fallthru
        _
    $region6: #{tpu_custom_call.1} parent=1 // loop_footer
      %s20 = sadd.s32 1, %s16
    $region7: #{tpu_custom_call.1} parent=1 // loop_footer_branch
      %15 = sbr.rel target = $region3
    $region8: #{tpu_custom_call.1} parent=1 // loop_exit
      _
    %556 = vsyncpa [#allocation7], 1
    %s557 = scalar_lea.sflag [#allocation7], 1
    %558 = vsyncpa %s557, 1
    %559 = vsyncpa [#allocation8], 1
    %s560 = scalar_lea.sflag [#allocation8], 1
    %561 = vsyncpa %s560, 1

</llo_original>
